<compile_context>
chip_gen: v7x
topology: tpu7x:2x2x1
jax: 0.10.0
libtpu: 0.0.40
codegen_flags: <defaults>
</compile_context>

<pallas_src>
import jax
import jax.numpy as jnp
from jax.experimental import pallas as pl
from jax.experimental.pallas import tpu as pltpu


def _round_up(n, m):
    return ((n + m - 1) // m) * m


# --------------------------------------------------------------------------
# Kernel
# --------------------------------------------------------------------------
def _make_fcnet_kernel(num_hidden, compute_dtype):
    """Kernel over one batch tile: hidden Linears+ReLU, fc_last+tanh, scale."""

    def kernel(*refs):
        idx = 0
        x_ref = refs[idx]; idx += 1
        hidden_w, hidden_b = [], []
        for _ in range(num_hidden):
            hidden_w.append(refs[idx]); idx += 1
            hidden_b.append(refs[idx]); idx += 1
        wl_ref = refs[idx]; idx += 1
        bl_ref = refs[idx]; idx += 1
        sw_ref = refs[idx]; idx += 1
        sb_ref = refs[idx]; idx += 1
        out_ref = refs[idx]

        h = x_ref[...].astype(jnp.float32)
        for w_ref, b_ref in zip(hidden_w, hidden_b):
            z = jnp.dot(h.astype(compute_dtype), w_ref[...],
                        preferred_element_type=jnp.float32)
            h = jnp.maximum(z + b_ref[...], 0.0)          # Linear bias + relu

        z = jnp.dot(h.astype(compute_dtype), wl_ref[...],
                    preferred_element_type=jnp.float32) + bl_ref[...]
        t = jnp.tanh(z)                                   # tanh(fc_last(x))
        out = t * sw_ref[...] + sb_ref[...]               # scale: Linear(1, 1)
        out_ref[...] = out.astype(out_ref.dtype)

    return kernel


# --------------------------------------------------------------------------
# One-time parameter preparation (transpose + lane padding + dtype cast).
# Call once; reuse the returned params for every forward call.
# --------------------------------------------------------------------------
def prepare_fcnet_params(hidden_weights, hidden_biases, w_last, b_last,
                         w_scale, b_scale, *, pad_lanes=True,
                         compute_dtype=jnp.float32):
    """hidden_weights[i]: torch layout (fan_out, fan_in); biases (fan_out,).
    w_last: (1, hidden), b_last: (1,), w_scale: (1,1), b_scale: (1,)."""
    padded_w, padded_b = [], []
    prev_out_pad = None
    for i, (w, b) in enumerate(zip(hidden_weights, hidden_biases)):
        wt = jnp.transpose(w).astype(jnp.float32)          # (fan_in, fan_out)
        fan_in, fan_out = wt.shape
        fo_pad = _round_up(fan_out, 128) if pad_lanes else fan_out
        fi_pad = prev_out_pad if (i > 0 and prev_out_pad is not None) else fan_in
        wt_p = jnp.zeros((fi_pad, fo_pad), jnp.float32)
        wt_p = wt_p.at[:fan_in, :fan_out].set(wt)
        b_p = jnp.zeros((1, fo_pad), jnp.float32)
        b_p = b_p.at[0, :fan_out].set(b.astype(jnp.float32))
        padded_w.append(wt_p.astype(compute_dtype))
        padded_b.append(b_p)                               # bias stays f32
        prev_out_pad = fo_pad

    wl = jnp.transpose(w_last).astype(jnp.float32)         # (hidden, 1)
    fi = wl.shape[0]
    fi_pad = prev_out_pad if prev_out_pad is not None else fi
    wl_p = jnp.zeros((fi_pad, 1), jnp.float32).at[:fi, :].set(wl)
    wl_p = wl_p.astype(compute_dtype)
    bl_p = jnp.reshape(b_last.astype(jnp.float32), (1, 1))
    sw = jnp.reshape(w_scale.astype(jnp.float32), (1, 1))
    sb = jnp.reshape(b_scale.astype(jnp.float32), (1, 1))
    return dict(hidden_w=padded_w, hidden_b=padded_b, w_last=wl_p, b_last=bl_p,
                w_scale=sw, b_scale=sb, compute_dtype=compute_dtype)


# --------------------------------------------------------------------------
# Forward wrapper
# --------------------------------------------------------------------------
def fcnet_forward(x, params, *, block_batch=None):
    hidden_w = params["hidden_w"]
    hidden_b = params["hidden_b"]
    w_last, b_last = params["w_last"], params["b_last"]
    w_scale, b_scale = params["w_scale"], params["b_scale"]
    compute_dtype = params["compute_dtype"]

    batch, in_dim = x.shape
    num_hidden = len(hidden_w)

    # Batch tile: multiple of 8 sublanes, capped so VMEM stays far under the
    # 64 MiB (v7x) / 128 MiB (v5e/v6e) budget even with 2x double-buffering.
    if block_batch is None:
        block_batch = min(512, _round_up(batch, 8))
    tb = block_batch
    padded_batch = _round_up(batch, tb)
    if padded_batch != batch:
        x = jnp.pad(x, ((0, padded_batch - batch), (0, 0)))
    grid = (padded_batch // tb,)

    operands = [x]
    in_specs = [pl.BlockSpec((tb, in_dim), lambda i: (i, 0))]
    for w, b in zip(hidden_w, hidden_b):
        operands += [w, b]
        in_specs += [pl.BlockSpec(w.shape, lambda i: (0, 0)),   # VMEM-resident
                     pl.BlockSpec(b.shape, lambda i: (0, 0))]
    operands += [w_last, b_last, w_scale, b_scale]
    in_specs += [pl.BlockSpec(w_last.shape, lambda i: (0, 0)),
                 pl.BlockSpec(b_last.shape, lambda i: (0, 0)),
                 pl.BlockSpec(w_scale.shape, lambda i: (0, 0)),
                 pl.BlockSpec(b_scale.shape, lambda i: (0, 0))]
    out_specs = pl.BlockSpec((tb, 1), lambda i: (i, 0))

    # Advisory cost estimate so XLA overlaps this small call with neighbors.
    flops = 0
    for w in hidden_w:
        flops += 2 * padded_batch * w.shape[0] * w.shape[1]
    flops += 2 * padded_batch * w_last.shape[0] * w_last.shape[1]
    bytes_accessed = x.size * x.dtype.itemsize + padded_batch * 4
    for a in list(hidden_w) + list(hidden_b) + [w_last, b_last, w_scale, b_scale]:
        bytes_accessed += a.size * a.dtype.itemsize
    ce = pl.CostEstimate(flops=int(flops), transcendentals=int(padded_batch),
                         bytes_accessed=int(bytes_accessed))

    kernel = _make_fcnet_kernel(num_hidden, compute_dtype)
    out = pl.pallas_call(
        kernel,
        out_shape=jax.ShapeDtypeStruct((padded_batch, 1), jnp.float32),
        grid=grid,
        in_specs=in_specs,
        out_specs=out_specs,
        compiler_params=pltpu.CompilerParams(
            dimension_semantics=("parallel",)),   # megacore sharding on v7x
        cost_estimate=ce,
    )(*operands)
    return out[:batch]


# --------------------------------------------------------------------------
# Pure-JAX reference (mirrors FCNet.forward exactly)
# --------------------------------------------------------------------------
def fcnet_reference(x, hidden_weights, hidden_biases, w_last, b_last,
                    w_scale, b_scale):
    h = x
    for w, b in zip(hidden_weights, hidden_biases):
        h = jnp.maximum(h @ w.T + b, 0.0)
    h = jnp.tanh(h @ w_last.T + b_last)
    h = h @ w_scale.T + b_scale
    return h


if __name__ == "__main__":
    in_dim = 16
    layer_sizes = [32, 32]
    batch = 8

    key = jax.random.PRNGKey(0)
    dims = [in_dim] + layer_sizes
    hidden_weights, hidden_biases = [], []
    k = key
    for fan_in, fan_out in zip(dims[:-1], dims[1:]):
        k, k1, k2 = jax.random.split(k, 3)
        hidden_weights.append(
            jax.random.normal(k1, (fan_out, fan_in), jnp.float32)
            / jnp.sqrt(jnp.float32(fan_in)))
        hidden_biases.append(
            jax.random.normal(k2, (fan_out,), jnp.float32) * 0.1)
    k, k1, k2 = jax.random.split(k, 3)
    w_last = (jax.random.normal(k1, (1, dims[-1]), jnp.float32)
              / jnp.sqrt(jnp.float32(dims[-1])))
    b_last = jax.random.normal(k2, (1,), jnp.float32) * 0.1
    k, k1, k2 = jax.random.split(k, 3)
    w_scale = jax.random.normal(k1, (1, 1), jnp.float32)
    b_scale = jax.random.normal(k2, (1,), jnp.float32) * 0.1
    k, kx = jax.random.split(k)
    x = jax.random.normal(kx, (batch, in_dim), jnp.float32)

    # One-time prep (transpose + lane padding); reused across forward calls.
    params = prepare_fcnet_params(hidden_weights, hidden_biases, w_last,
                                  b_last, w_scale, b_scale,
                                  pad_lanes=True,
                                  compute_dtype=jnp.float32)

    out = fcnet_forward(x, params)
    out = jax.block_until_ready(out)

    ref = fcnet_reference(x, hidden_weights, hidden_biases, w_last, b_last,
                          w_scale, b_scale)
    assert out.shape == (batch, 1)
    assert jnp.allclose(out, ref, atol=1e-5, rtol=1e-5), \
        float(jnp.max(jnp.abs(out - ref)))

    print("KERNEL_OK")
</pallas_src>

<mosaic_0001>
module attributes {stable_mosaic.version = 11 : i64} {
  func.func @kernel(%arg0: i32, %arg1: memref<8x16xf32, #tpu.memory_space<vmem>>, %arg2: memref<16x128xf32, #tpu.memory_space<vmem>>, %arg3: memref<1x128xf32, #tpu.memory_space<vmem>>, %arg4: memref<128x128xf32, #tpu.memory_space<vmem>>, %arg5: memref<1x128xf32, #tpu.memory_space<vmem>>, %arg6: memref<128x1xf32, #tpu.memory_space<vmem>>, %arg7: memref<1x1xf32, #tpu.memory_space<vmem>>, %arg8: memref<1x1xf32, #tpu.memory_space<vmem>>, %arg9: memref<1x1xf32, #tpu.memory_space<vmem>>, %arg10: memref<8x1xf32, #tpu.memory_space<vmem>>) attributes {dimension_semantics = [#tpu.dimension_semantics<parallel>], iteration_bounds = array<i64: 1>, scalar_prefetch = 0 : i64, scratch_operands = 0 : i64, tpu.core_type = #tpu.core_type<tc>, window_params = [{transform_indices = @transform_0, window_bounds = array<i64: 8, 16>}, {pipeline_mode = #tpu.pipeline_mode<synchronous>, transform_indices = @transform_1, window_bounds = array<i64: 16, 128>}, {pipeline_mode = #tpu.pipeline_mode<synchronous>, transform_indices = @transform_2, window_bounds = array<i64: 1, 128>}, {pipeline_mode = #tpu.pipeline_mode<synchronous>, transform_indices = @transform_3, window_bounds = array<i64: 128, 128>}, {pipeline_mode = #tpu.pipeline_mode<synchronous>, transform_indices = @transform_4, window_bounds = array<i64: 1, 128>}, {pipeline_mode = #tpu.pipeline_mode<synchronous>, transform_indices = @transform_5, window_bounds = array<i64: 128, 1>}, {pipeline_mode = #tpu.pipeline_mode<synchronous>, transform_indices = @transform_6, window_bounds = array<i64: 1, 1>}, {pipeline_mode = #tpu.pipeline_mode<synchronous>, transform_indices = @transform_7, window_bounds = array<i64: 1, 1>}, {pipeline_mode = #tpu.pipeline_mode<synchronous>, transform_indices = @transform_8, window_bounds = array<i64: 1, 1>}, {transform_indices = @transform_9, window_bounds = array<i64: 8, 1>}]} {
    %c0 = arith.constant 0 : index
    %c0_0 = arith.constant 0 : index
    %0 = vector.load %arg1[%c0, %c0_0] : memref<8x16xf32, #tpu.memory_space<vmem>>, vector<8x16xf32>
    %c0_1 = arith.constant 0 : index
    %c0_2 = arith.constant 0 : index
    %1 = vector.load %arg2[%c0_1, %c0_2] : memref<16x128xf32, #tpu.memory_space<vmem>>, vector<16x128xf32>
    %cst = arith.constant dense<0.000000e+00> : vector<8x128xf32>
    %2 = tpu.matmul %0, %1, %cst {dimension_numbers = #tpu.dot_dimension_numbers<[1], [0], [0], [1], [0, 0, 1, 1], [], []>} : vector<8x16xf32>, vector<16x128xf32>, vector<8x128xf32> -> vector<8x128xf32>
    %c0_3 = arith.constant 0 : index
    %c0_4 = arith.constant 0 : index
    %3 = vector.load %arg3[%c0_3, %c0_4] : memref<1x128xf32, #tpu.memory_space<vmem>>, vector<1x128xf32>
    %4 = vector.broadcast %3 : vector<1x128xf32> to vector<8x128xf32>
    %5 = arith.addf %2, %4 : vector<8x128xf32>
    %cst_5 = arith.constant 0.000000e+00 : f32
    %6 = vector.broadcast %cst_5 : f32 to vector<8x128xf32>
    %7 = arith.maximumf %5, %6 : vector<8x128xf32>
    %c0_6 = arith.constant 0 : index
    %c0_7 = arith.constant 0 : index
    %8 = vector.load %arg4[%c0_6, %c0_7] : memref<128x128xf32, #tpu.memory_space<vmem>>, vector<128x128xf32>
    %cst_8 = arith.constant dense<0.000000e+00> : vector<8x128xf32>
    %9 = tpu.matmul %7, %8, %cst_8 {dimension_numbers = #tpu.dot_dimension_numbers<[1], [0], [0], [1], [0, 0, 1, 1], [], []>} : vector<8x128xf32>, vector<128x128xf32>, vector<8x128xf32> -> vector<8x128xf32>
    %c0_9 = arith.constant 0 : index
    %c0_10 = arith.constant 0 : index
    %10 = vector.load %arg5[%c0_9, %c0_10] : memref<1x128xf32, #tpu.memory_space<vmem>>, vector<1x128xf32>
    %11 = vector.broadcast %10 : vector<1x128xf32> to vector<8x128xf32>
    %12 = arith.addf %9, %11 : vector<8x128xf32>
    %cst_11 = arith.constant 0.000000e+00 : f32
    %13 = vector.broadcast %cst_11 : f32 to vector<8x128xf32>
    %14 = arith.maximumf %12, %13 : vector<8x128xf32>
    %c0_12 = arith.constant 0 : index
    %c0_13 = arith.constant 0 : index
    %15 = vector.load %arg6[%c0_12, %c0_13] : memref<128x1xf32, #tpu.memory_space<vmem>>, vector<128x1xf32>
    %cst_14 = arith.constant dense<0.000000e+00> : vector<8x1xf32>
    %16 = tpu.matmul %14, %15, %cst_14 {dimension_numbers = #tpu.dot_dimension_numbers<[1], [0], [0], [1], [0, 0, 1, 1], [], []>} : vector<8x128xf32>, vector<128x1xf32>, vector<8x1xf32> -> vector<8x1xf32>
    %c0_15 = arith.constant 0 : index
    %c0_16 = arith.constant 0 : index
    %17 = vector.load %arg7[%c0_15, %c0_16] : memref<1x1xf32, #tpu.memory_space<vmem>>, vector<1x1xf32>
    %18 = vector.broadcast %17 : vector<1x1xf32> to vector<8x1xf32>
    %19 = arith.addf %16, %18 : vector<8x1xf32>
    %20 = math.tanh %19 : vector<8x1xf32>
    %c0_17 = arith.constant 0 : index
    %c0_18 = arith.constant 0 : index
    %21 = vector.load %arg8[%c0_17, %c0_18] : memref<1x1xf32, #tpu.memory_space<vmem>>, vector<1x1xf32>
    %22 = vector.broadcast %21 : vector<1x1xf32> to vector<8x1xf32>
    %23 = arith.mulf %20, %22 : vector<8x1xf32>
    %c0_19 = arith.constant 0 : index
    %c0_20 = arith.constant 0 : index
    %24 = vector.load %arg9[%c0_19, %c0_20] : memref<1x1xf32, #tpu.memory_space<vmem>>, vector<1x1xf32>
    %25 = vector.broadcast %24 : vector<1x1xf32> to vector<8x1xf32>
    %26 = arith.addf %23, %25 : vector<8x1xf32>
    %c0_21 = arith.constant 0 : index
    %c0_22 = arith.constant 0 : index
    %27 = vector.load %arg10[%c0_21, %c0_22] : memref<8x1xf32, #tpu.memory_space<vmem>>, vector<8x1xf32>
    tpu.vector_store %arg10[%c0_21, %c0_22], %26 {strides = array<i32>} : memref<8x1xf32, #tpu.memory_space<vmem>>, vector<8x1xf32>,
    return
  }
  func.func @transform_0(%arg0: i32) -> (i32, i32) {
    %c0_i32 = arith.constant 0 : i32
    %c0_i32_0 = arith.constant 0 : i32
    return %arg0, %c0_i32 : i32, i32
  }
  func.func @transform_1(%arg0: i32) -> (i32, i32) {
    %c0_i32 = arith.constant 0 : i32
    %c0_i32_0 = arith.constant 0 : i32
    %c0_i32_1 = arith.constant 0 : i32
    return %c0_i32, %c0_i32_0 : i32, i32
  }
  func.func @transform_2(%arg0: i32) -> (i32, i32) {
    %c0_i32 = arith.constant 0 : i32
    %c0_i32_0 = arith.constant 0 : i32
    %c0_i32_1 = arith.constant 0 : i32
    return %c0_i32, %c0_i32_0 : i32, i32
  }
  func.func @transform_3(%arg0: i32) -> (i32, i32) {
    %c0_i32 = arith.constant 0 : i32
    %c0_i32_0 = arith.constant 0 : i32
    %c0_i32_1 = arith.constant 0 : i32
    return %c0_i32, %c0_i32_0 : i32, i32
  }
  func.func @transform_4(%arg0: i32) -> (i32, i32) {
    %c0_i32 = arith.constant 0 : i32
    %c0_i32_0 = arith.constant 0 : i32
    %c0_i32_1 = arith.constant 0 : i32
    return %c0_i32, %c0_i32_0 : i32, i32
  }
  func.func @transform_5(%arg0: i32) -> (i32, i32) {
    %c0_i32 = arith.constant 0 : i32
    %c0_i32_0 = arith.constant 0 : i32
    %c0_i32_1 = arith.constant 0 : i32
    return %c0_i32, %c0_i32_0 : i32, i32
  }
  func.func @transform_6(%arg0: i32) -> (i32, i32) {
    %c0_i32 = arith.constant 0 : i32
    %c0_i32_0 = arith.constant 0 : i32
    %c0_i32_1 = arith.constant 0 : i32
    return %c0_i32, %c0_i32_0 : i32, i32
  }
  func.func @transform_7(%arg0: i32) -> (i32, i32) {
    %c0_i32 = arith.constant 0 : i32
    %c0_i32_0 = arith.constant 0 : i32
    %c0_i32_1 = arith.constant 0 : i32
    return %c0_i32, %c0_i32_0 : i32, i32
  }
  func.func @transform_8(%arg0: i32) -> (i32, i32) {
    %c0_i32 = arith.constant 0 : i32
    %c0_i32_0 = arith.constant 0 : i32
    %c0_i32_1 = arith.constant 0 : i32
    return %c0_i32, %c0_i32_0 : i32, i32
  }
  func.func @transform_9(%arg0: i32) -> (i32, i32) {
    %c0_i32 = arith.constant 0 : i32
    %c0_i32_0 = arith.constant 0 : i32
    return %arg0, %c0_i32 : i32, i32
  }
}

</mosaic_0001>

<llo_original>
// kernel: tpu_custom_call.1
$region0: #{tpu_custom_call.1}
  #allocation0 [shape = 'u32[]', space=smem, size = 0x4, offset = 0x4, fixed_abs, tag = 'smem constant byte address 0x4 - core index']
  #allocation1 [shape = 'u32[144,128]{1,0:T(1,128)}', space=vmem, size = 0x12000, scoped, tag = 'internal scratch']
  #allocation2 [shape = 'f32[1,1]{1,0:T(1,128)S(1)}', space=vmem, size = 0x200, scoped, tag = 'scoped memory for tpu_custom_call.1']
  #allocation3 [shape = 'f32[1,1]{1,0:T(1,128)S(1)}', space=vmem, size = 0x200, scoped, tag = 'scoped memory for tpu_custom_call.1']
  #allocation4 [shape = 'f32[1,1]{1,0:T(1,128)S(1)}', space=vmem, size = 0x200, scoped, tag = 'scoped memory for tpu_custom_call.1']
  %s0 = inlined_call_operand.hbm [shape: f32[8,16], index: 0, kind: input, shape index: {}]
  %s1 = inlined_call_operand.vmem [shape: f32[16,128], index: 1, kind: input, shape index: {}]
  %s2 = inlined_call_operand.vmem [shape: f32[1,128], index: 2, kind: input, shape index: {}]
  %s3 = inlined_call_operand.vmem [shape: f32[128,128], index: 3, kind: input, shape index: {}]
  %s4 = inlined_call_operand.vmem [shape: f32[1,128], index: 4, kind: input, shape index: {}]
  %s5 = inlined_call_operand.vmem [shape: f32[128,1], index: 5, kind: input, shape index: {}]
  %s6 = inlined_call_operand.<no memory space> [shape: f32[1,1], index: 6, kind: input, shape index: {}]
  %s7 = inlined_call_operand.<no memory space> [shape: f32[1,1], index: 7, kind: input, shape index: {}]
  %s8 = inlined_call_operand.<no memory space> [shape: f32[1,1], index: 8, kind: input, shape index: {}]
  %s9 = inlined_call_operand.vmem [shape: f32[8,1], index: 9, kind: output, shape index: {}]
  %s10 = sld [smem:[#allocation0]]
  $region50: #{tpu_custom_call.1} parent=0
    _
  %s12 = ssub.s32 1, %s10
  %s13 = scalar_select 0, %s12, %s10
  %v14 = vstv %s6
  %15 = vst [vmem:[#allocation2] sm:$0x1] %v14
  %v16 = vstv %s7
  %17 = vst [vmem:[#allocation3] sm:$0x1] %v16
  %v18 = vstv %s8
  %19 = vst [vmem:[#allocation4] sm:$0x1] %v18
  $region1: #{tpu_custom_call.1} parent=0
    #allocation5 [shape = 'u8[4096]{0}', space=vmem, size = 0x1000, scoped, tag = 'input window, operand 0, single buffered']
    #allocation6 [shape = 's32[1]{0}', space=sflag, size = 0x4, scoped, tag = 'scoped memory for tpu_custom_call.1']
    %20 = vsyncpa [#allocation6], 0
    // Predicated region
    $region2: #{tpu_custom_call.1} parent=1 // pred_check
      _
    $region3: #{tpu_custom_call.1} parent=1 // pred_check_branch
      %22 = sbr.rel (0) target = $region5
    $region4: #{tpu_custom_call.1} parent=1 // pred_region
      %s24 = ssub.s32 128, 128
      %25 = vsyncadd [#allocation6], %s24
      %s27 = sshll.u32 [#allocation5], 4
      %s28 = int_to_ptr.vmem [resolvable:$true] %s27
      %30 = dma.hbm_to_vmem [thread:$0]  %s0, 128, %s28, [#allocation6]
    $region5: #{tpu_custom_call.1} parent=1 // pred_fallthru
      _
    // Predicated region
    $region6: #{tpu_custom_call.1} parent=1 // pred_check
      _
    $region7: #{tpu_custom_call.1} parent=1 // pred_check_branch
      %32 = sbr.rel (0) target = $region9
    $region8: #{tpu_custom_call.1} parent=1 // pred_region
      _
    $region9: #{tpu_custom_call.1} parent=1 // pred_fallthru
      _
    // Predicated region
    $region10: #{tpu_custom_call.1} parent=1 // pred_check
      _
    $region11: #{tpu_custom_call.1} parent=1 // pred_check_branch
      %34 = sbr.rel (0) target = $region13
    $region12: #{tpu_custom_call.1} parent=1 // pred_region
      _
    $region13: #{tpu_custom_call.1} parent=1 // pred_fallthru
      _
    // Predicated region
    $region14: #{tpu_custom_call.1} parent=1 // pred_check
      _
    $region15: #{tpu_custom_call.1} parent=1 // pred_check_branch
      %36 = sbr.rel (0) target = $region17
    $region16: #{tpu_custom_call.1} parent=1 // pred_region
      _
    $region17: #{tpu_custom_call.1} parent=1 // pred_fallthru
      _
    // Predicated region
    $region18: #{tpu_custom_call.1} parent=1 // pred_check
      _
    $region19: #{tpu_custom_call.1} parent=1 // pred_check_branch
      %38 = sbr.rel (0) target = $region21
    $region20: #{tpu_custom_call.1} parent=1 // pred_region
      _
    $region21: #{tpu_custom_call.1} parent=1 // pred_fallthru
      _
    // Predicated region
    $region22: #{tpu_custom_call.1} parent=1 // pred_check
      _
    $region23: #{tpu_custom_call.1} parent=1 // pred_check_branch
      %40 = sbr.rel (0) target = $region25
    $region24: #{tpu_custom_call.1} parent=1 // pred_region
      _
    $region25: #{tpu_custom_call.1} parent=1 // pred_fallthru
      _
    // Predicated region
    $region26: #{tpu_custom_call.1} parent=1 // pred_check
      _
    $region27: #{tpu_custom_call.1} parent=1 // pred_check_branch
      %42 = sbr.rel (0) target = $region29
    $region28: #{tpu_custom_call.1} parent=1 // pred_region
      _
    $region29: #{tpu_custom_call.1} parent=1 // pred_fallthru
      _
    // Predicated region
    $region30: #{tpu_custom_call.1} parent=1 // pred_check
      _
    $region31: #{tpu_custom_call.1} parent=1 // pred_check_branch
      %44 = sbr.rel (0) target = $region33
    $region32: #{tpu_custom_call.1} parent=1 // pred_region
      _
    $region33: #{tpu_custom_call.1} parent=1 // pred_fallthru
      _
    // Predicated region
    $region34: #{tpu_custom_call.1} parent=1 // pred_check
      _
    $region35: #{tpu_custom_call.1} parent=1 // pred_check_branch
      %46 = sbr.rel (0) target = $region37
    $region36: #{tpu_custom_call.1} parent=1 // pred_region
      _
    $region37: #{tpu_custom_call.1} parent=1 // pred_fallthru
      _
    // Predicated region
    $region38: #{tpu_custom_call.1} parent=1 // pred_check
      _
    $region39: #{tpu_custom_call.1} parent=1 // pred_check_branch
      %48 = sbr.rel (0) target = $region41
    $region40: #{tpu_custom_call.1} parent=1 // pred_region
      %49 = dma.done [#allocation6], 128
    $region41: #{tpu_custom_call.1} parent=1 // pred_fallthru
      _
    %v50 = vld [vmem:[#allocation5] sm:$0xff]
    %v51 = vld [vmem:[%s1] sm:$0xff]
    %v52 = vld [vmem:[%s1 + $0x8] sm:$0xff]
    %v53 = vld [vmem:[%s2] sm:$0x1]
    %v55 = vlaneseq
    %v56 = vshrl.u32 %v55, 7
    %v57 = vsub.s32 0, %v56
    %v58 = vrot.slane %v53, %v57
    %vm60 = vcmask 130048
    %v62 = vsel %vm60, %v50, 0
    %64 = vmatprep.subr.mxu0 0.0
    %65 = vmatpush1.msra.mxu0 %v51
    %66 = vmatprep.subr.mxu0 0.0
    %67 = vmatpush1.msra.mxu0 %v52
    %68 = vmatprep.subr.mxu0 0.0
    %69 = vmatpush1.msra.mxu0 0.0
    %70 = vmatprep.subr.mxu0 0.0
    %71 = vmatpush1.msra.mxu0 0.0
    %72 = vmatprep.subr.mxu0 0.0
    %73 = vmatpush1.msra.mxu0 0.0
    %74 = vmatprep.subr.mxu0 0.0
    %75 = vmatpush1.msra.mxu0 0.0
    %76 = vmatprep.subr.mxu0 0.0
    %77 = vmatpush1.msra.mxu0 0.0
    %78 = vmatprep.subr.mxu0 0.0
    %79 = vmatpush1.msra.mxu0 0.0
    %80 = vmatprep.subr.mxu0 0.0
    %81 = vmatpush1.msra.mxu0 0.0
    %82 = vmatprep.subr.mxu0 0.0
    %83 = vmatpush1.msra.mxu0 0.0
    %84 = vmatprep.subr.mxu0 0.0
    %85 = vmatpush1.msra.mxu0 0.0
    %86 = vmatprep.subr.mxu0 0.0
    %87 = vmatpush1.msra.mxu0 0.0
    %88 = vmatprep.subr.mxu0 0.0
    %89 = vmatpush1.msra.mxu0 0.0
    %90 = vmatprep.subr.mxu0 0.0
    %91 = vmatpush1.msra.mxu0 0.0
    %92 = vmatprep.subr.mxu0 0.0
    %93 = vmatpush1.msra.mxu0 0.0
    %94 = vmatprep.subr.mxu0 0.0
    %95 = vmatpush1.msra.mxu0 0.0
    %96 = vmatprep.subr.mxu0 0.0
    %97 = vmatpush1.msra.mxu0 0.0
    %98 = vmatprep.subr.mxu0 0.0
    %99 = vmatpush1.msra.mxu0 0.0
    %100 = vmatprep.subr.mxu0 0.0
    %101 = vmatpush1.msra.mxu0 0.0
    %102 = vmatprep.subr.mxu0 0.0
    %103 = vmatpush1.msra.mxu0 0.0
    %104 = vmatprep.subr.mxu0 0.0
    %105 = vmatpush1.msra.mxu0 0.0
    %106 = vmatprep.subr.mxu0 0.0
    %107 = vmatpush1.msra.mxu0 0.0
    %108 = vmatprep.subr.mxu0 0.0
    %109 = vmatpush1.msra.mxu0 0.0
    %110 = vmatprep.subr.mxu0 0.0
    %111 = vmatpush1.msra.mxu0 0.0
    %112 = vmatprep.subr.mxu0 0.0
    %113 = vmatpush1.msra.mxu0 0.0
    %114 = vmatprep.subr.mxu0 0.0
    %115 = vmatpush1.msra.mxu0 0.0
    %116 = vmatprep.subr.mxu0 0.0
    %117 = vmatpush1.msra.mxu0 0.0
    %118 = vmatprep.subr.mxu0 0.0
    %119 = vmatpush1.msra.mxu0 0.0
    %120 = vmatprep.subr.mxu0 0.0
    %121 = vmatpush1.msra.mxu0 0.0
    %122 = vmatprep.subr.mxu0 0.0
    %123 = vmatpush1.msra.mxu0 0.0
    %124 = vmatprep.subr.mxu0 0.0
    %125 = vmatpush1.msra.mxu0 0.0
    %126 = vmatprep.subr.mxu0 0.0
    %127 = vmatpush1.msra.mxu0 0.0
    %128 = vmatprep.mubr.f32.mxu0 0.0
    %129 = vmatmul.mubr.f32.gmra.mrb[0].mxu0 %v62
    %v130 = vpop.f32.mrb[0].mxu0
    %v131 = vadd.f32 %v58, %v130
    %v132 = vpop.f32.mrb[0].mxu0
    %133 = vdwg.mxu0
    %v134 = vmax.f32 %v131, 0.0
    %v135 = vld [vmem:[%s3] sm:$0xff]
    %v136 = vld [vmem:[%s3 + $0x8] sm:$0xff]
    %v137 = vld [vmem:[%s3 + $0x10] sm:$0xff]
    %v138 = vld [vmem:[%s3 + $0x18] sm:$0xff]
    %v139 = vld [vmem:[%s3 + $0x20] sm:$0xff]
    %v140 = vld [vmem:[%s3 + $0x28] sm:$0xff]
    %v141 = vld [vmem:[%s3 + $0x30] sm:$0xff]
    %v142 = vld [vmem:[%s3 + $0x38] sm:$0xff]
    %v143 = vld [vmem:[%s3 + $0x40] sm:$0xff]
    %v144 = vld [vmem:[%s3 + $0x48] sm:$0xff]
    %v145 = vld [vmem:[%s3 + $0x50] sm:$0xff]
    %v146 = vld [vmem:[%s3 + $0x58] sm:$0xff]
    %v147 = vld [vmem:[%s3 + $0x60] sm:$0xff]
    %v148 = vld [vmem:[%s3 + $0x68] sm:$0xff]
    %v149 = vld [vmem:[%s3 + $0x70] sm:$0xff]
    %v150 = vld [vmem:[%s3 + $0x78] sm:$0xff]
    %v151 = vld [vmem:[%s4] sm:$0x1]
    %v153 = vlaneseq
    %v154 = vshrl.u32 %v153, 7
    %v155 = vsub.s32 0, %v154
    %v156 = vrot.slane %v151, %v155
    %158 = vmatprep.subr.mxu0 0.0
    %159 = vmatpush1.msra.mxu0 %v135
    %160 = vmatprep.subr.mxu0 0.0
    %161 = vmatpush1.msra.mxu0 %v136
    %162 = vmatprep.subr.mxu0 0.0
    %163 = vmatpush1.msra.mxu0 %v137
    %164 = vmatprep.subr.mxu0 0.0
    %165 = vmatpush1.msra.mxu0 %v138
    %166 = vmatprep.subr.mxu0 0.0
    %167 = vmatpush1.msra.mxu0 %v139
    %168 = vmatprep.subr.mxu0 0.0
    %169 = vmatpush1.msra.mxu0 %v140
    %170 = vmatprep.subr.mxu0 0.0
    %171 = vmatpush1.msra.mxu0 %v141
    %172 = vmatprep.subr.mxu0 0.0
    %173 = vmatpush1.msra.mxu0 %v142
    %174 = vmatprep.subr.mxu0 0.0
    %175 = vmatpush1.msra.mxu0 %v143
    %176 = vmatprep.subr.mxu0 0.0
    %177 = vmatpush1.msra.mxu0 %v144
    %178 = vmatprep.subr.mxu0 0.0
    %179 = vmatpush1.msra.mxu0 %v145
    %180 = vmatprep.subr.mxu0 0.0
    %181 = vmatpush1.msra.mxu0 %v146
    %182 = vmatprep.subr.mxu0 0.0
    %183 = vmatpush1.msra.mxu0 %v147
    %184 = vmatprep.subr.mxu0 0.0
    %185 = vmatpush1.msra.mxu0 %v148
    %186 = vmatprep.subr.mxu0 0.0
    %187 = vmatpush1.msra.mxu0 %v149
    %188 = vmatprep.subr.mxu0 0.0
    %189 = vmatpush1.msra.mxu0 %v150
    %190 = vmatprep.subr.mxu0 0.0
    %191 = vmatpush1.msra.mxu0 0.0
    %192 = vmatprep.subr.mxu0 0.0
    %193 = vmatpush1.msra.mxu0 0.0
    %194 = vmatprep.subr.mxu0 0.0
    %195 = vmatpush1.msra.mxu0 0.0
    %196 = vmatprep.subr.mxu0 0.0
    %197 = vmatpush1.msra.mxu0 0.0
    %198 = vmatprep.subr.mxu0 0.0
    %199 = vmatpush1.msra.mxu0 0.0
    %200 = vmatprep.subr.mxu0 0.0
    %201 = vmatpush1.msra.mxu0 0.0
    %202 = vmatprep.subr.mxu0 0.0
    %203 = vmatpush1.msra.mxu0 0.0
    %204 = vmatprep.subr.mxu0 0.0
    %205 = vmatpush1.msra.mxu0 0.0
    %206 = vmatprep.subr.mxu0 0.0
    %207 = vmatpush1.msra.mxu0 0.0
    %208 = vmatprep.subr.mxu0 0.0
    %209 = vmatpush1.msra.mxu0 0.0
    %210 = vmatprep.subr.mxu0 0.0
    %211 = vmatpush1.msra.mxu0 0.0
    %212 = vmatprep.subr.mxu0 0.0
    %213 = vmatpush1.msra.mxu0 0.0
    %214 = vmatprep.subr.mxu0 0.0
    %215 = vmatpush1.msra.mxu0 0.0
    %216 = vmatprep.subr.mxu0 0.0
    %217 = vmatpush1.msra.mxu0 0.0
    %218 = vmatprep.subr.mxu0 0.0
    %219 = vmatpush1.msra.mxu0 0.0
    %220 = vmatprep.subr.mxu0 0.0
    %221 = vmatpush1.msra.mxu0 0.0
    %222 = vmatprep.mubr.f32.mxu0 0.0
    %223 = vmatmul.mubr.f32.gmra.mrb[0].mxu0 %v134
    %v224 = vpop.f32.mrb[0].mxu0
    %v225 = vadd.f32 %v156, %v224
    %v226 = vpop.f32.mrb[0].mxu0
    %227 = vdwg.mxu0
    %v228 = vmax.f32 %v225, 0.0
    %v229 = vld [vmem:[%s5] sm:$0xff]
    %v230 = vld [vmem:[%s5 + $0x8] sm:$0xff]
    %v231 = vld [vmem:[%s5 + $0x10] sm:$0xff]
    %v232 = vld [vmem:[%s5 + $0x18] sm:$0xff]
    %v233 = vld [vmem:[%s5 + $0x20] sm:$0xff]
    %v234 = vld [vmem:[%s5 + $0x28] sm:$0xff]
    %v235 = vld [vmem:[%s5 + $0x30] sm:$0xff]
    %v236 = vld [vmem:[%s5 + $0x38] sm:$0xff]
    %v237 = vld [vmem:[%s5 + $0x40] sm:$0xff]
    %v238 = vld [vmem:[%s5 + $0x48] sm:$0xff]
    %v239 = vld [vmem:[%s5 + $0x50] sm:$0xff]
    %v240 = vld [vmem:[%s5 + $0x58] sm:$0xff]
    %v241 = vld [vmem:[%s5 + $0x60] sm:$0xff]
    %v242 = vld [vmem:[%s5 + $0x68] sm:$0xff]
    %v243 = vld [vmem:[%s5 + $0x70] sm:$0xff]
    %v244 = vld [vmem:[%s5 + $0x78] sm:$0xff]
    %v245 = vld [vmem:[#allocation2] sm:$0x1]
    %v247 = vlaneseq
    %v248 = vshrl.u32 %v247, 7
    %v249 = vsub.s32 0, %v248
    %v250 = vrot.slane %v245, %v249
    %252 = vmatprep.subr.mxu0 0.0
    %253 = vmatpush1.msra.mxu0 %v229
    %254 = vmatprep.subr.mxu0 0.0
    %255 = vmatpush1.msra.mxu0 %v230
    %256 = vmatprep.subr.mxu0 0.0
    %257 = vmatpush1.msra.mxu0 %v231
    %258 = vmatprep.subr.mxu0 0.0
    %259 = vmatpush1.msra.mxu0 %v232
    %260 = vmatprep.subr.mxu0 0.0
    %261 = vmatpush1.msra.mxu0 %v233
    %262 = vmatprep.subr.mxu0 0.0
    %263 = vmatpush1.msra.mxu0 %v234
    %264 = vmatprep.subr.mxu0 0.0
    %265 = vmatpush1.msra.mxu0 %v235
    %266 = vmatprep.subr.mxu0 0.0
    %267 = vmatpush1.msra.mxu0 %v236
    %268 = vmatprep.subr.mxu0 0.0
    %269 = vmatpush1.msra.mxu0 %v237
    %270 = vmatprep.subr.mxu0 0.0
    %271 = vmatpush1.msra.mxu0 %v238
    %272 = vmatprep.subr.mxu0 0.0
    %273 = vmatpush1.msra.mxu0 %v239
    %274 = vmatprep.subr.mxu0 0.0
    %275 = vmatpush1.msra.mxu0 %v240
    %276 = vmatprep.subr.mxu0 0.0
    %277 = vmatpush1.msra.mxu0 %v241
    %278 = vmatprep.subr.mxu0 0.0
    %279 = vmatpush1.msra.mxu0 %v242
    %280 = vmatprep.subr.mxu0 0.0
    %281 = vmatpush1.msra.mxu0 %v243
    %282 = vmatprep.subr.mxu0 0.0
    %283 = vmatpush1.msra.mxu0 %v244
    %284 = vmatprep.subr.mxu0 0.0
    %285 = vmatpush1.msra.mxu0 0.0
    %286 = vmatprep.subr.mxu0 0.0
    %287 = vmatpush1.msra.mxu0 0.0
    %288 = vmatprep.subr.mxu0 0.0
    %289 = vmatpush1.msra.mxu0 0.0
    %290 = vmatprep.subr.mxu0 0.0
    %291 = vmatpush1.msra.mxu0 0.0
    %292 = vmatprep.subr.mxu0 0.0
    %293 = vmatpush1.msra.mxu0 0.0
    %294 = vmatprep.subr.mxu0 0.0
    %295 = vmatpush1.msra.mxu0 0.0
    %296 = vmatprep.subr.mxu0 0.0
    %297 = vmatpush1.msra.mxu0 0.0
    %298 = vmatprep.subr.mxu0 0.0
    %299 = vmatpush1.msra.mxu0 0.0
    %300 = vmatprep.subr.mxu0 0.0
    %301 = vmatpush1.msra.mxu0 0.0
    %302 = vmatprep.subr.mxu0 0.0
    %303 = vmatpush1.msra.mxu0 0.0
    %304 = vmatprep.subr.mxu0 0.0
    %305 = vmatpush1.msra.mxu0 0.0
    %306 = vmatprep.subr.mxu0 0.0
    %307 = vmatpush1.msra.mxu0 0.0
    %308 = vmatprep.subr.mxu0 0.0
    %309 = vmatpush1.msra.mxu0 0.0
    %310 = vmatprep.subr.mxu0 0.0
    %311 = vmatpush1.msra.mxu0 0.0
    %312 = vmatprep.subr.mxu0 0.0
    %313 = vmatpush1.msra.mxu0 0.0
    %314 = vmatprep.subr.mxu0 0.0
    %315 = vmatpush1.msra.mxu0 0.0
    %316 = vmatprep.mubr.f32.mxu0 0.0
    %317 = vmatmul.mubr.f32.gmra.mrb[0].mxu0 %v228
    %v318 = vpop.f32.mrb[0].mxu0
    %v319 = vadd.f32 %v250, %v318
    %v320 = vpop.f32.mrb[0].mxu0
    %321 = vdwg.mxu0
    %v322 = vtanh.pop %v319
    %v323 = vld [vmem:[#allocation3] sm:$0x1]
    %v325 = vlaneseq
    %v326 = vshrl.u32 %v325, 7
    %v327 = vsub.s32 0, %v326
    %v328 = vrot.slane %v323, %v327
    %v330 = vmul.f32 %v322, %v328
    %v331 = vld [vmem:[#allocation4] sm:$0x1]
    %v333 = vlaneseq
    %v334 = vshrl.u32 %v333, 7
    %v335 = vsub.s32 0, %v334
    %v336 = vrot.slane %v331, %v335
    %v338 = vadd.f32 %v330, %v336
    %vm339 = vcmask 7168
    %340 = vst.msk [vmem:[%s9] sm:$0xff] %vm339, %v338
    // Predicated region
    $region42: #{tpu_custom_call.1} parent=1 // pred_check
      _
    $region43: #{tpu_custom_call.1} parent=1 // pred_check_branch
      %342 = sbr.rel (0) target = $region45
    $region44: #{tpu_custom_call.1} parent=1 // pred_region
      _
    $region45: #{tpu_custom_call.1} parent=1 // pred_fallthru
      _
    // Predicated region
    $region46: #{tpu_custom_call.1} parent=1 // pred_check
      _
    $region47: #{tpu_custom_call.1} parent=1 // pred_check_branch
      %344 = sbr.rel (0) target = $region49
    $region48: #{tpu_custom_call.1} parent=1 // pred_region
      _
    $region49: #{tpu_custom_call.1} parent=1 // pred_fallthru
      _
    %345 = vsyncpa [#allocation6], 1

</llo_original>
